<compile_context>
chip_gen: v7x
topology: tpu7x:2x2x1
jax: 0.10.0
libtpu: 0.0.40
codegen_flags: <defaults>
</compile_context>

<pallas_src>
import jax
import jax.numpy as jnp
from jax.experimental import pallas as pl
from jax.experimental.pallas import tpu as pltpu


def _value_kernel(atk_ref, payoff_ref, dfd_ref, v_ref):
    payoff = payoff_ref[...].astype(jnp.float32)   # (tT, A, A)
    atk = atk_ref[...].astype(jnp.float32)         # (tT, A)
    dfd = dfd_ref[...]                             # (1, A)  f32

    # b[t, i] = sum_j payoff[t, i, j] * dfd[j]
    #   (payoff pre-contracted against dfd; the atk contraction follows)
    b = jnp.sum(payoff * dfd[0][None, None, :], axis=-1)   # (tT, A)

    # v[t] = sum_i atk[t, i] * b[t, i]
    v = jnp.sum(atk * b, axis=-1)                           # (tT,)

    # lane-dense store: type axis on the lane dimension.
    v_ref[...] = v[None, :]                                 # (1, tT)


def _auto_block_t(T, A, itemsize, budget_bytes=16 * 1024 * 1024):
    """Largest T-tile whose double-buffered payoff+atk stays under `budget_bytes`."""
    per_t = 2 * (A * A + A) * itemsize          # x2 for double buffering
    max_t = max(1, budget_bytes // max(per_t, 1))
    if max_t >= T:
        return T                                 # single full block
    return max(128, (max_t // 128) * 128)        # lane-dense out needs mult. of 128


def value_forward(prior, atk_s, dfd_s, payoff, is_atk=False, block_t=None):
    """Pallas equivalent of Value.forward with vn=None."""
    atk = jnp.asarray(atk_s)                     # keep caller dtype (bf16 ok)
    pay = jnp.asarray(payoff)                    # keep caller dtype (bf16 ok)
    T, A = atk.shape
    assert pay.shape == (T, A, A)
    dfd = jnp.asarray(dfd_s, jnp.float32).reshape(1, A)
    prior_f32 = jnp.asarray(prior, jnp.float32).reshape(T)

    itemsize = max(jnp.dtype(atk.dtype).itemsize, jnp.dtype(pay.dtype).itemsize)
    if block_t is None:
        block_t = _auto_block_t(T, A, itemsize)

    if block_t >= T:
        bt, t_pad = T, T                         # single block: full-dim tiles
    else:
        bt = max(128, (block_t // 128) * 128)    # keep (8,128)/lane-dense legal
        t_pad = ((T + bt - 1) // bt) * bt
    if t_pad != T:
        atk = jnp.pad(atk, ((0, t_pad - T), (0, 0)))
        pay = jnp.pad(pay, ((0, t_pad - T), (0, 0), (0, 0)))

    grid = (t_pad // bt,)
    tile_bytes = 2 * bt * (A * A + A) * itemsize                # dbl-buffered tiles
    vmem_limit = int(min(100 << 20, max(32 << 20, tile_bytes + (2 << 20))))

    v_row = pl.pallas_call(
        _value_kernel,
        out_shape=jax.ShapeDtypeStruct((1, t_pad), jnp.float32),
        grid=grid,
        in_specs=[
            pl.BlockSpec((bt, A), lambda i: (i, 0)),        # atk_s tile
            pl.BlockSpec((bt, A, A), lambda i: (i, 0, 0)),  # payoff tile
            pl.BlockSpec((1, A), lambda i: (0, 0)),         # dfd_s (untiled)
        ],
        out_specs=pl.BlockSpec((1, bt), lambda i: (0, i)),  # lane-dense v
        compiler_params=pltpu.CompilerParams(
            dimension_semantics=("parallel",),
            vmem_limit_bytes=vmem_limit,
        ),
    )(atk, pay, dfd)

    v = v_row[0, :T]                              # (T,) per-type value

    # TODO(synk): the `vn is not None` recursion (BayesFast posterior update,
    # host-side .item() branching, recursive value-net calls) is data-dependent
    # Python control flow with undefined submodules and has no clean Pallas
    # equivalent; only the vn=None path is implemented.

    if is_atk:
        return v                                  # (T,)  == a.squeeze()
    return jnp.dot(prior_f32, v)                  # scalar == matmul(prior, a.squeeze())


if __name__ == "__main__":
    key = jax.random.PRNGKey(0)
    k1, k2, k3, k4, k5, k6, k7 = jax.random.split(key, 7)

    # --- small case (module's shipped sizes), f32, tight check, both branches ---
    n_types, n_actions = 4, 8
    payoff = jax.random.normal(k1, (n_types, n_actions, n_actions), jnp.float32)
    prior = jax.random.uniform(k2, (n_types,), jnp.float32)
    prior = prior / jnp.sum(prior)
    atk_s = jax.nn.softmax(jax.random.normal(k3, (n_types, n_actions)), axis=-1)
    dfd_s = jax.nn.softmax(jax.random.normal(k4, (n_actions,)))

    v_atk = value_forward(prior, atk_s, dfd_s, payoff, is_atk=True)
    v_dfd = value_forward(prior, atk_s, dfd_s, payoff, is_atk=False)
    jax.block_until_ready((v_atk, v_dfd))

    ref_per_type = jnp.einsum("ti,tij,j->t", atk_s, payoff, dfd_s)
    ref_scalar = jnp.dot(prior, ref_per_type)
    assert v_atk.shape == (n_types,)
    assert v_dfd.shape == ()
    assert jnp.allclose(v_atk, ref_per_type, atol=1e-5, rtol=1e-5)
    assert jnp.allclose(v_dfd, ref_scalar, atol=1e-5, rtol=1e-5)

    # --- larger case exercising the gridded / padded / bf16 streaming path ---
    T2, A2 = 300, 16
    payoff2 = jax.random.normal(k5, (T2, A2, A2), jnp.float32).astype(jnp.bfloat16)
    atk2 = jax.nn.softmax(jax.random.normal(k6, (T2, A2)), axis=-1).astype(jnp.bfloat16)
    dfd2 = jax.nn.softmax(jax.random.normal(k7, (A2,)))
    prior2 = jnp.ones((T2,), jnp.float32) / T2

    v2 = value_forward(prior2, atk2, dfd2, payoff2, is_atk=True, block_t=128)
    jax.block_until_ready(v2)

    ref2 = jnp.einsum(
        "ti,tij,j->t",
        atk2.astype(jnp.float32), payoff2.astype(jnp.float32), dfd2,
    )
    assert v2.shape == (T2,)
    assert jnp.allclose(v2, ref2, atol=1e-3, rtol=1e-3)

    print("KERNEL_OK")
</pallas_src>

<mosaic_0001>
module attributes {stable_mosaic.version = 11 : i64} {
  func.func @_value_kernel(%arg0: i32, %arg1: memref<4x8xf32, #tpu.memory_space<vmem>>, %arg2: memref<4x8x8xf32, #tpu.memory_space<vmem>>, %arg3: memref<1x8xf32, #tpu.memory_space<vmem>>, %arg4: memref<1x4xf32, #tpu.memory_space<vmem>>) attributes {dimension_semantics = [#tpu.dimension_semantics<parallel>], iteration_bounds = array<i64: 1>, scalar_prefetch = 0 : i64, scratch_operands = 0 : i64, tpu.core_type = #tpu.core_type<tc>, window_params = [{transform_indices = @transform_0, window_bounds = array<i64: 4, 8>}, {transform_indices = @transform_1, window_bounds = array<i64: 4, 8, 8>}, {pipeline_mode = #tpu.pipeline_mode<synchronous>, transform_indices = @transform_2, window_bounds = array<i64: 1, 8>}, {transform_indices = @transform_3, window_bounds = array<i64: 1, 4>}]} {
    %c0 = arith.constant 0 : index
    %c0_0 = arith.constant 0 : index
    %c0_1 = arith.constant 0 : index
    %0 = vector.load %arg2[%c0, %c0_0, %c0_1] : memref<4x8x8xf32, #tpu.memory_space<vmem>>, vector<4x8x8xf32>
    %c0_2 = arith.constant 0 : index
    %c0_3 = arith.constant 0 : index
    %1 = vector.load %arg1[%c0_2, %c0_3] : memref<4x8xf32, #tpu.memory_space<vmem>>, vector<4x8xf32>
    %c0_4 = arith.constant 0 : index
    %c0_5 = arith.constant 0 : index
    %2 = vector.load %arg3[%c0_4, %c0_5] : memref<1x8xf32, #tpu.memory_space<vmem>>, vector<1x8xf32>
    %3 = vector.shape_cast %2 : vector<1x8xf32> to vector<8xf32>
    %4 = vector.shape_cast %3 : vector<8xf32> to vector<1x1x8xf32>
    %5 = vector.broadcast %4 : vector<1x1x8xf32> to vector<4x8x8xf32>
    %6 = arith.mulf %0, %5 : vector<4x8x8xf32>
    %cst = arith.constant dense<0.000000e+00> : vector<4x8xf32>
    %7 = vector.multi_reduction <add>, %6, %cst [2] : vector<4x8x8xf32> to vector<4x8xf32>
    %8 = arith.mulf %1, %7 : vector<4x8xf32>
    %cst_6 = arith.constant dense<0.000000e+00> : vector<4xf32>
    %9 = vector.multi_reduction <add>, %8, %cst_6 [1] : vector<4x8xf32> to vector<4xf32>
    %10 = vector.shape_cast %9 : vector<4xf32> to vector<1x4xf32>
    %c0_7 = arith.constant 0 : index
    %c0_8 = arith.constant 0 : index
    %11 = vector.load %arg4[%c0_7, %c0_8] : memref<1x4xf32, #tpu.memory_space<vmem>>, vector<1x4xf32>
    tpu.vector_store %arg4[%c0_7, %c0_8], %10 {strides = array<i32>} : memref<1x4xf32, #tpu.memory_space<vmem>>, vector<1x4xf32>,
    return
  }
  func.func @transform_0(%arg0: i32) -> (i32, i32) {
    %c0_i32 = arith.constant 0 : i32
    %c0_i32_0 = arith.constant 0 : i32
    return %arg0, %c0_i32 : i32, i32
  }
  func.func @transform_1(%arg0: i32) -> (i32, i32, i32) {
    %c0_i32 = arith.constant 0 : i32
    %c0_i32_0 = arith.constant 0 : i32
    %c0_i32_1 = arith.constant 0 : i32
    return %arg0, %c0_i32, %c0_i32_0 : i32, i32, i32
  }
  func.func @transform_2(%arg0: i32) -> (i32, i32) {
    %c0_i32 = arith.constant 0 : i32
    %c0_i32_0 = arith.constant 0 : i32
    %c0_i32_1 = arith.constant 0 : i32
    return %c0_i32, %c0_i32_0 : i32, i32
  }
  func.func @transform_3(%arg0: i32) -> (i32, i32) {
    %c0_i32 = arith.constant 0 : i32
    %c0_i32_0 = arith.constant 0 : i32
    return %c0_i32, %arg0 : i32, i32
  }
}

</mosaic_0001>

<llo_original>
// kernel: tpu_custom_call.1
$region0: #{tpu_custom_call.1}
  #allocation0 [shape = 'u32[]', space=smem, size = 0x4, offset = 0x4, fixed_abs, tag = 'smem constant byte address 0x4 - core index']
  #allocation1 [shape = 'u32[144,128]{1,0:T(1,128)}', space=vmem, size = 0x12000, scoped, tag = 'internal scratch']
  %s0 = inlined_call_operand.hbm [shape: f32[4,8], index: 0, kind: input, shape index: {}]
  %s1 = inlined_call_operand.hbm [shape: f32[4,8,8], index: 1, kind: input, shape index: {}]
  %s2 = inlined_call_operand.vmem [shape: f32[1,8], index: 2, kind: input, shape index: {}]
  %s3 = inlined_call_operand.hbm [shape: f32[1,4], index: 3, kind: output, shape index: {}]
  %s4 = sld [smem:[#allocation0]]
  $region30: #{tpu_custom_call.1} parent=0
    _
  %s6 = ssub.s32 1, %s4
  %s7 = scalar_select 0, %s6, %s4
  $region1: #{tpu_custom_call.1} parent=0
    #allocation2 [shape = 'u8[2048]{0}', space=vmem, size = 0x800, scoped, tag = 'input window, operand 0, single buffered']
    #allocation3 [shape = 's32[1]{0}', space=sflag, size = 0x4, scoped, tag = 'scoped memory for tpu_custom_call.1']
    #allocation4 [shape = 's32[1]{0}', space=sflag, size = 0x4, scoped, tag = 'scoped memory for tpu_custom_call.1']
    #allocation5 [shape = 'u8[16384]{0}', space=vmem, size = 0x4000, scoped, tag = 'input window, operand 1, single buffered']
    #allocation6 [shape = 's32[1]{0}', space=sflag, size = 0x4, scoped, tag = 'scoped memory for tpu_custom_call.1']
    #allocation7 [shape = 'u8[512]{0}', space=vmem, size = 0x400, scoped, tag = 'output window, operand 0, single buffered']
    %8 = vsyncpa [#allocation3], 0
    %9 = vsyncpa [#allocation6], 0
    %10 = vsyncpa [#allocation4], 0
    // Predicated region
    $region2: #{tpu_custom_call.1} parent=1 // pred_check
      _
    $region3: #{tpu_custom_call.1} parent=1 // pred_check_branch
      %12 = sbr.rel (0) target = $region5
    $region4: #{tpu_custom_call.1} parent=1 // pred_region
      %s14 = ssub.s32 64, 64
      %15 = vsyncadd [#allocation3], %s14
      %s17 = sshll.u32 [#allocation2], 4
      %s18 = int_to_ptr.vmem [resolvable:$true] %s17
      %20 = dma.hbm_to_vmem [thread:$0]  %s0, 64, %s18, [#allocation3]
    $region5: #{tpu_custom_call.1} parent=1 // pred_fallthru
      _
    // Predicated region
    $region6: #{tpu_custom_call.1} parent=1 // pred_check
      _
    $region7: #{tpu_custom_call.1} parent=1 // pred_check_branch
      %22 = sbr.rel (0) target = $region9
    $region8: #{tpu_custom_call.1} parent=1 // pred_region
      %s24 = ssub.s32 512, 512
      %25 = vsyncadd [#allocation6], %s24
      %s26 = sshll.u32 [#allocation5], 4
      %s27 = int_to_ptr.vmem [resolvable:$true] %s26
      %32 = dma.hbm_to_vmem [thread:$0]  %s1, 512, %s27, [#allocation6], 128, 128, 8
    $region9: #{tpu_custom_call.1} parent=1 // pred_fallthru
      _
    // Predicated region
    $region10: #{tpu_custom_call.1} parent=1 // pred_check
      _
    $region11: #{tpu_custom_call.1} parent=1 // pred_check_branch
      %34 = sbr.rel (0) target = $region13
    $region12: #{tpu_custom_call.1} parent=1 // pred_region
      _
    $region13: #{tpu_custom_call.1} parent=1 // pred_fallthru
      _
    // Predicated region
    $region14: #{tpu_custom_call.1} parent=1 // pred_check
      _
    $region15: #{tpu_custom_call.1} parent=1 // pred_check_branch
      %36 = sbr.rel (0) target = $region17
    $region16: #{tpu_custom_call.1} parent=1 // pred_region
      %37 = dma.done [#allocation3], 64
    $region17: #{tpu_custom_call.1} parent=1 // pred_fallthru
      _
    // Predicated region
    $region18: #{tpu_custom_call.1} parent=1 // pred_check
      _
    $region19: #{tpu_custom_call.1} parent=1 // pred_check_branch
      %39 = sbr.rel (0) target = $region21
    $region20: #{tpu_custom_call.1} parent=1 // pred_region
      %40 = dma.done [#allocation6], 512
    $region21: #{tpu_custom_call.1} parent=1 // pred_fallthru
      _
    %v41 = vld [vmem:[#allocation5] sm:$0xff]
    %v42 = vld [vmem:[#allocation5 + $0x8] sm:$0xff]
    %v43 = vld [vmem:[#allocation5 + $0x10] sm:$0xff]
    %v44 = vld [vmem:[#allocation5 + $0x18] sm:$0xff]
    %v45 = vld [vmem:[#allocation2] sm:$0xf]
    %v46 = vld [vmem:[%s2] sm:$0x1]
    %v48 = vlaneseq
    %v49 = vshrl.u32 %v48, 7
    %v50 = vsub.s32 0, %v49
    %v51 = vrot.slane %v46, %v50
    %v53 = vmul.f32 %v41, %v51
    %v54 = vmul.f32 %v42, %v51
    %v55 = vmul.f32 %v43, %v51
    %v56 = vmul.f32 %v44, %v51
    %vm57 = vcmask 64512
    %v58 = vsel %vm57, %v53, 0.0
    %59 = vadd.xlane.f32.xlu0 %v58
    %v60 = vpop.xlane.xlu0 %59
    %v61 = vsel %vm57, %v54, 0.0
    %62 = vadd.xlane.f32.xlu0 %v61
    %v63 = vpop.xlane.xlu0 %62
    %v64 = vsel %vm57, %v55, 0.0
    %65 = vadd.xlane.f32.xlu0 %v64
    %v66 = vpop.xlane.xlu0 %65
    %v67 = vsel %vm57, %v56, 0.0
    %68 = vadd.xlane.f32.xlu0 %v67
    %v69 = vpop.xlane.xlu0 %68
    %v74 = vlaneseq
    %v75 = vand.u32 %v74, 127
    %v76 = vlaneseq
    %v77 = vshrl.u32 %v76, 7
    %v78 = vsub.s32 %v75, %v77
    %v79 = vrot.slane %v60, %v78
    %v80 = vlaneseq
    %v81 = vshrl.u32 %v80, 7
    %v82 = vsub.s32 %v75, %v81
    %v83 = vrot.slane %v63, %v82
    %v84 = vlaneseq
    %v85 = vshrl.u32 %v84, 7
    %v86 = vsub.s32 %v75, %v85
    %v87 = vrot.slane %v66, %v86
    %v88 = vlaneseq
    %v89 = vshrl.u32 %v88, 7
    %v90 = vsub.s32 %v75, %v89
    %v91 = vrot.slane %v69, %v90
    %vm92 = vcmask 1041409
    %v93 = vsel %vm92, %v83, %v79
    %vm94 = vcmask 1042434
    %v95 = vsel %vm94, %v87, %v93
    %vm96 = vcmask 1043459
    %v97 = vsel %vm96, %v91, %v95
    %v99 = vmul.f32 %v45, %v97
    %vm100 = vcmask 60416
    %v101 = vsel %vm100, %v99, 0.0
    %102 = vadd.xlane.f32.xlu0 %v101
    %v103 = vpop.xlane.xlu0 %102
    %v105 = vlaneseq
    %v106 = vshrl.u32 %v105, 7
    %v107 = vsub.s32 %v75, %v106
    %v108 = vrot.slane %v103, %v107
    %vm110 = vcmask 24576
    %111 = vst.msk [vmem:[#allocation7] sm:$0x1] %vm110, %v108
    // Predicated region
    $region22: #{tpu_custom_call.1} parent=1 // pred_check
      _
    $region23: #{tpu_custom_call.1} parent=1 // pred_check_branch
      %113 = sbr.rel (0) target = $region25
    $region24: #{tpu_custom_call.1} parent=1 // pred_region
      %s115 = ssub.s32 16, 16
      %116 = vsyncadd [#allocation4], %s115
      %s118 = sshll.u32 [#allocation7], 4
      %s119 = int_to_ptr.vmem [resolvable:$true] %s118
      %121 = dma.vmem_to_hbm [thread:$0]  %s119, 16, %s3, [#allocation4]
    $region25: #{tpu_custom_call.1} parent=1 // pred_fallthru
      _
    // Predicated region
    $region26: #{tpu_custom_call.1} parent=1 // pred_check
      _
    $region27: #{tpu_custom_call.1} parent=1 // pred_check_branch
      %123 = sbr.rel (0) target = $region29
    $region28: #{tpu_custom_call.1} parent=1 // pred_region
      %124 = dma.done [#allocation4], 16
    $region29: #{tpu_custom_call.1} parent=1 // pred_fallthru
      _
    %125 = vsyncpa [#allocation3], 1
    %126 = vsyncpa [#allocation6], 1
    %127 = vsyncpa [#allocation4], 1

</llo_original>
